<compile_context>
chip_gen: v5e
topology: v5e:2x2
jax: 0.10.0
libtpu: 0.0.40
codegen_flags: <defaults>
</compile_context>

<pallas_src>
import jax
import jax.numpy as jnp
from jax.experimental import pallas as pl
from jax.experimental.pallas import tpu as pltpu


def _make_kernel(with_att):
    def kernel(vec_ref, q_ref, w_ref, b_ref, y_ref, *maybe_att):
        # vec_ref: (TB, N, D)   q_ref: (TB, H)   w_ref: (D, H)   b_ref: (1, H) f32
        # y_ref:   (TB, D)      maybe_att[0]: (TB, N)  (optional)
        TB, N, D = vec_ref.shape

        vec = vec_ref[...]                                 # native dtype (bf16 fast path)

        # Hidden projection: ONE fat MXU matmul (TB*N, D) @ (D, H), f32 accumulate.
        # NOTE: the leading-dim merge is layout-free when N is a multiple of the
        # sublane pack (8 for f32, 16 for bf16); pick N accordingly if possible.
        h = jnp.tanh(
            jnp.dot(vec.reshape(TB * N, D), w_ref[...],
                    preferred_element_type=jnp.float32)
            + b_ref[...]                                   # (1, H) f32, sublane bcast
        ).reshape(TB, N, -1)                               # (TB, N, H) f32

        # Attention logits: VPU multiply + XLU lane reduce over H (keeps MXU free).
        q = q_ref[...].astype(jnp.float32)                 # (TB, H)
        scores = jnp.sum(h * q[:, None, :], axis=-1)       # (TB, N) f32

        # Softmax over N (last axis).
        m = jnp.max(scores, axis=-1, keepdims=True)
        e = jnp.exp(scores - m)
        s = jnp.sum(e, axis=-1, keepdims=True)
        r = pl.reciprocal(s, approx=True)                  # EUP vrcp (free slot)
        r = r * (2.0 - s * r)                              # one Newton step -> f32-accurate
        alpha = e * r                                      # (TB, N) f32

        # Weighted sum on the VPU/XLU: avoids TB degenerate M=1 MXU matmuls
        # (push/pop cadence on the vector-extended slot at large TB).
        y = jnp.sum(alpha[:, :, None] * vec, axis=1)       # (TB, D) f32

        y_ref[...] = y.astype(y_ref.dtype)
        if with_att:
            maybe_att[0][...] = alpha.astype(maybe_att[0].dtype)

    return kernel


def _vmem_capacity_bytes():
    try:
        return int(pltpu.get_tpu_info().vmem_capacity_bytes)
    except Exception:
        return 64 << 20  # conservative fallback (v7x per-TC VMEM)


def _choose_block_b(B, N, D, H, itemsize, vmem_budget, split_for_two_cores):
    """Pick the per-step batch tile TB.

    TB is either the whole batch (block dim == full array dim, always legal) or
    a multiple of the dtype-specific sublane pack. Targets a vec block in the
    MiB range (HBM-roofline knee), capped by the VMEM budget, and prefers a
    tile that divides B exactly (no wrapper pad copy), with an even step count
    (balanced two-TensorCore sharding) when possible.
    """
    pack = max(8, 32 // itemsize)                    # 8 f32, 16 bf16, 32 int8/fp8
    if B <= pack:
        return B

    # Per-batch-row VMEM footprint: double-buffered in/out blocks + f32 temps
    # (h, alpha*vec product, scores/softmax) used inside the kernel body.
    per_b = (2 * (N * D + H + D + N) * itemsize
             + (N * H + N * D + 4 * N + D) * 4)
    tb_budget = max(pack, (vmem_budget // max(per_b, 1)) // pack * pack)
    # Target ~4 MiB of vec per step (memory-bound: big blocks amortize the
    # ~0.35 us/step grid overhead and approach the HBM roofline).
    tb_target = max(pack, ((4 << 20) // max(N * D * itemsize, 1)) // pack * pack)
    tb = min(tb_budget, tb_target)

    if tb >= B:
        # Whole batch fits comfortably. On two-TC parts (v7x-like, small VMEM)
        # split evenly in two when that needs no padding; else one big step.
        if split_for_two_cores and B % (2 * pack) == 0:
            return B // 2
        return B

    # Prefer a tile that divides B exactly (skips the wrapper pad copy); among
    # those, prefer an even number of steps (balances v7x's two TensorCores).
    for even_only in (True, False):
        for cand in range(tb, pack - 1, -pack):
            if B % cand == 0 and (not even_only or (B // cand) % 2 == 0):
                return cand
    return tb  # no exact divisor: wrapper falls back to padding


def personalized_attentive_pooling(vec_input, query_input, weight, bias, *,
                                   block_b=None, return_attention=True):
    """vec_input: (B, N, D), query_input: (B, H), weight: (D, H), bias: (H,).

    weight is the nn.Linear(value_emb_dim, attention_hidden_dim) weight stored
    pre-transposed as (D, H) so the kernel computes x @ W + b directly.
    Returns (y: (B, D), vec_att2: (B, N)) (or just y if return_attention=False).
    """
    B, N, D = vec_input.shape
    H = query_input.shape[-1]
    dt = vec_input.dtype
    itemsize = jnp.dtype(dt).itemsize

    capacity = _vmem_capacity_bytes()
    if block_b is not None:
        TB = block_b
    else:
        TB = _choose_block_b(
            B, N, D, H, itemsize,
            vmem_budget=max(24 << 20, capacity // 2),
            split_for_two_cores=capacity <= (80 << 20))

    Bp = -(-B // TB) * TB
    if Bp != B:
        # TODO(synk): handle a ragged batch tail with clipped index maps instead
        # of this pad copy; _choose_block_b avoids it whenever a divisor exists.
        vec_p = jnp.pad(vec_input, ((0, Bp - B), (0, 0), (0, 0)))
        q_p = jnp.pad(query_input, ((0, Bp - B), (0, 0)))
    else:
        vec_p, q_p = vec_input, query_input

    # Grid-invariant params: match weight dtype to vec (bf16 MXU fast path, no
    # hidden per-step promotion); bias cast to f32 once (added to the f32 acc).
    w = weight.astype(dt)
    b2 = bias.reshape(1, H).astype(jnp.float32)

    y_spec = pl.BlockSpec((TB, D), lambda b: (b, 0))       # lane-dense 2-D
    if return_attention:
        out_shape = (jax.ShapeDtypeStruct((Bp, D), dt),
                     jax.ShapeDtypeStruct((Bp, N), dt))
        out_specs = [y_spec, pl.BlockSpec((TB, N), lambda b: (b, 0))]
    else:
        out_shape = jax.ShapeDtypeStruct((Bp, D), dt)
        out_specs = y_spec

    # VMEM bound: double-buffered in/out blocks + resident weight/bias + f32 temps.
    needed = (2 * (TB * N * D + TB * H + TB * D + TB * N) * itemsize
              + 2 * (D * H * itemsize + H * 4)
              + (TB * N * H + TB * N * D + 4 * TB * N + TB * D) * 4)
    vmem_limit = int(max(32 << 20, min(needed + (4 << 20), (capacity * 7) // 8)))

    bytes_out = Bp * D * itemsize + (Bp * N * itemsize if return_attention else 0)
    cost = pl.CostEstimate(
        flops=2 * Bp * N * D * H + 2 * Bp * N * H + 2 * Bp * N * D,
        transcendentals=Bp * N * H + Bp * N,
        bytes_accessed=(Bp * N * D + Bp * H) * itemsize + D * H * itemsize
                       + H * 4 + bytes_out,
    )

    outs = pl.pallas_call(
        _make_kernel(return_attention),
        out_shape=out_shape,
        grid_spec=pltpu.PrefetchScalarGridSpec(
            num_scalar_prefetch=0,
            grid=(Bp // TB,),
            in_specs=[
                pl.BlockSpec((TB, N, D), lambda b: (b, 0, 0)),   # vec_input
                pl.BlockSpec((TB, H), lambda b: (b, 0)),         # query
                pl.BlockSpec((D, H), lambda b: (0, 0)),          # weight (resident)
                pl.BlockSpec((1, H), lambda b: (0, 0)),          # bias (resident)
            ],
            out_specs=out_specs,
        ),
        compiler_params=pltpu.CompilerParams(
            dimension_semantics=("parallel",),
            vmem_limit_bytes=vmem_limit,
        ),
        cost_estimate=cost,
    )(vec_p, q_p, w, b2)

    if return_attention:
        y, att = outs
        if Bp != B:
            y, att = y[:B], att[:B]
        return y, att
    y = outs
    if Bp != B:
        y = y[:B]
    return y


def _reference(vec_input, query_input, weight, bias):
    v = vec_input.astype(jnp.float32)
    q = query_input.astype(jnp.float32)
    h = jnp.tanh(jnp.einsum("bnd,dh->bnh", v, weight.astype(jnp.float32)) + bias)
    scores = jnp.einsum("bnh,bh->bn", h, q)
    alpha = jax.nn.softmax(scores, axis=-1)
    y = jnp.einsum("bn,bnd->bd", alpha, v)
    return y, alpha


if __name__ == "__main__":
    B, N, D, H = 2, 8, 32, 16      # batch, num vectors, value_emb_dim, attn_hidden_dim

    key = jax.random.PRNGKey(0)
    k1, k2, k3, k4 = jax.random.split(key, 4)

    vec_input = jax.random.normal(k1, (B, N, D), dtype=jnp.float32)
    query_input = jax.random.normal(k2, (B, H), dtype=jnp.float32)

    # nn.Linear(value_emb_dim, attention_hidden_dim): weight (H, D), bias (H).
    # Stored pre-transposed as (D, H) for the kernel's x @ W convention.
    bound = 1.0 / (D ** 0.5)
    weight = jax.random.uniform(k3, (D, H), minval=-bound, maxval=bound,
                                dtype=jnp.float32)
    bias = jax.random.uniform(k4, (H,), minval=-bound, maxval=bound,
                              dtype=jnp.float32)

    y, att = personalized_attentive_pooling(vec_input, query_input, weight, bias)
    jax.block_until_ready((y, att))
    y_ref, att_ref = _reference(vec_input, query_input, weight, bias)
    assert jnp.allclose(y, y_ref, atol=2e-5, rtol=2e-5)
    assert jnp.allclose(att, att_ref, atol=2e-5, rtol=2e-5)

    # Check 2: larger batch, no padding, auto-chosen whole-batch / split tile.
    B2 = 20
    kk1, kk2 = jax.random.split(jax.random.PRNGKey(1))
    vec2 = jax.random.normal(kk1, (B2, N, D), dtype=jnp.float32)
    q2 = jax.random.normal(kk2, (B2, H), dtype=jnp.float32)
    y2, att2 = personalized_attentive_pooling(vec2, q2, weight, bias)
    jax.block_until_ready((y2, att2))
    y2_ref, att2_ref = _reference(vec2, q2, weight, bias)
    assert jnp.allclose(y2, y2_ref, atol=2e-5, rtol=2e-5)
    assert jnp.allclose(att2, att2_ref, atol=2e-5, rtol=2e-5)

    # Check 3: explicit multi-step path, divisor tile (no padding), 3 grid steps.
    B3 = 24
    kk3, kk4 = jax.random.split(jax.random.PRNGKey(2))
    vec3 = jax.random.normal(kk3, (B3, N, D), dtype=jnp.float32)
    q3 = jax.random.normal(kk4, (B3, H), dtype=jnp.float32)
    y3, att3 = personalized_attentive_pooling(vec3, q3, weight, bias, block_b=8)
    jax.block_until_ready((y3, att3))
    y3_ref, att3_ref = _reference(vec3, q3, weight, bias)
    assert jnp.allclose(y3, y3_ref, atol=2e-5, rtol=2e-5)
    assert jnp.allclose(att3, att3_ref, atol=2e-5, rtol=2e-5)

    # Check 4: padded-batch fallback path (block_b does not divide B).
    y4, att4 = personalized_attentive_pooling(vec2, q2, weight, bias, block_b=8)
    jax.block_until_ready((y4, att4))
    assert jnp.allclose(y4, y2_ref, atol=2e-5, rtol=2e-5)
    assert jnp.allclose(att4, att2_ref, atol=2e-5, rtol=2e-5)

    # Check 5: bf16 fast path (weight cast to bf16 in the wrapper), N sublane-aligned.
    Bb, Nb, Db, Hb = 4, 16, 64, 32
    kb1, kb2, kb3, kb4 = jax.random.split(jax.random.PRNGKey(3), 4)
    vecb = jax.random.normal(kb1, (Bb, Nb, Db), dtype=jnp.bfloat16)
    qb = jax.random.normal(kb2, (Bb, Hb), dtype=jnp.bfloat16)
    wb = jax.random.uniform(kb3, (Db, Hb), minval=-0.125, maxval=0.125,
                            dtype=jnp.float32)
    bb = jax.random.uniform(kb4, (Hb,), minval=-0.125, maxval=0.125,
                            dtype=jnp.float32)
    yb, attb = personalized_attentive_pooling(vecb, qb, wb, bb)
    jax.block_until_ready((yb, attb))
    yb_ref, attb_ref = _reference(vecb, qb, wb.astype(jnp.bfloat16), bb)
    assert jnp.allclose(yb.astype(jnp.float32), yb_ref, atol=5e-2, rtol=5e-2)
    assert jnp.allclose(attb.astype(jnp.float32), attb_ref, atol=5e-2, rtol=5e-2)

    print("KERNEL_OK")
</pallas_src>

<mosaic_0001>
module attributes {stable_mosaic.version = 11 : i64} {
  func.func @kernel(%arg0: i32, %arg1: memref<2x8x32xf32, #tpu.memory_space<vmem>>, %arg2: memref<2x16xf32, #tpu.memory_space<vmem>>, %arg3: memref<32x16xf32, #tpu.memory_space<vmem>>, %arg4: memref<1x16xf32, #tpu.memory_space<vmem>>, %arg5: memref<2x32xf32, #tpu.memory_space<vmem>>, %arg6: memref<2x8xf32, #tpu.memory_space<vmem>>) attributes {dimension_semantics = [#tpu.dimension_semantics<parallel>], iteration_bounds = array<i64: 1>, scalar_prefetch = 0 : i64, scratch_operands = 0 : i64, tpu.core_type = #tpu.core_type<tc>, window_params = [{transform_indices = @transform_0, window_bounds = array<i64: 2, 8, 32>}, {transform_indices = @transform_1, window_bounds = array<i64: 2, 16>}, {pipeline_mode = #tpu.pipeline_mode<synchronous>, transform_indices = @transform_2, window_bounds = array<i64: 32, 16>}, {pipeline_mode = #tpu.pipeline_mode<synchronous>, transform_indices = @transform_3, window_bounds = array<i64: 1, 16>}, {transform_indices = @transform_4, window_bounds = array<i64: 2, 32>}, {transform_indices = @transform_5, window_bounds = array<i64: 2, 8>}]} {
    %c0 = arith.constant 0 : index
    %c0_0 = arith.constant 0 : index
    %c0_1 = arith.constant 0 : index
    %0 = vector.load %arg1[%c0, %c0_0, %c0_1] : memref<2x8x32xf32, #tpu.memory_space<vmem>>, vector<2x8x32xf32>
    %1 = vector.shape_cast %0 : vector<2x8x32xf32> to vector<16x32xf32>
    %c0_2 = arith.constant 0 : index
    %c0_3 = arith.constant 0 : index
    %2 = vector.load %arg3[%c0_2, %c0_3] : memref<32x16xf32, #tpu.memory_space<vmem>>, vector<32x16xf32>
    %cst = arith.constant dense<0.000000e+00> : vector<16x16xf32>
    %3 = tpu.matmul %1, %2, %cst {dimension_numbers = #tpu.dot_dimension_numbers<[1], [0], [0], [1], [0, 0, 1, 1], [], []>} : vector<16x32xf32>, vector<32x16xf32>, vector<16x16xf32> -> vector<16x16xf32>
    %c0_4 = arith.constant 0 : index
    %c0_5 = arith.constant 0 : index
    %4 = vector.load %arg4[%c0_4, %c0_5] : memref<1x16xf32, #tpu.memory_space<vmem>>, vector<1x16xf32>
    %5 = vector.broadcast %4 : vector<1x16xf32> to vector<16x16xf32>
    %6 = arith.addf %3, %5 : vector<16x16xf32>
    %7 = math.tanh %6 : vector<16x16xf32>
    %8 = vector.shape_cast %7 : vector<16x16xf32> to vector<2x8x16xf32>
    %c0_6 = arith.constant 0 : index
    %c0_7 = arith.constant 0 : index
    %9 = vector.load %arg2[%c0_6, %c0_7] : memref<2x16xf32, #tpu.memory_space<vmem>>, vector<2x16xf32>
    %10 = vector.shape_cast %9 : vector<2x16xf32> to vector<2x1x16xf32>
    %11 = vector.broadcast %10 : vector<2x1x16xf32> to vector<2x8x16xf32>
    %12 = arith.mulf %8, %11 : vector<2x8x16xf32>
    %cst_8 = arith.constant dense<0.000000e+00> : vector<2x8xf32>
    %13 = vector.multi_reduction <add>, %12, %cst_8 [2] : vector<2x8x16xf32> to vector<2x8xf32>
    %cst_9 = arith.constant dense<0xFF800000> : vector<2xf32>
    %14 = vector.multi_reduction <maximumf>, %13, %cst_9 [1] : vector<2x8xf32> to vector<2xf32>
    %15 = vector.shape_cast %14 : vector<2xf32> to vector<2x1xf32>
    %16 = vector.broadcast %15 : vector<2x1xf32> to vector<2x8xf32>
    %17 = arith.subf %13, %16 : vector<2x8xf32>
    %18 = math.exp %17 : vector<2x8xf32>
    %cst_10 = arith.constant dense<0.000000e+00> : vector<2xf32>
    %19 = vector.multi_reduction <add>, %18, %cst_10 [1] : vector<2x8xf32> to vector<2xf32>
    %20 = vector.shape_cast %19 : vector<2xf32> to vector<2x1xf32>
    %21 = tpu.reciprocal %20 {approx = true} : vector<2x1xf32> -> vector<2x1xf32>
    %22 = arith.mulf %20, %21 : vector<2x1xf32>
    %cst_11 = arith.constant 2.000000e+00 : f32
    %23 = vector.broadcast %cst_11 : f32 to vector<2x1xf32>
    %24 = arith.subf %23, %22 : vector<2x1xf32>
    %25 = arith.mulf %21, %24 : vector<2x1xf32>
    %26 = vector.broadcast %25 : vector<2x1xf32> to vector<2x8xf32>
    %27 = arith.mulf %18, %26 : vector<2x8xf32>
    %28 = vector.shape_cast %27 : vector<2x8xf32> to vector<2x8x1xf32>
    %29 = vector.broadcast %28 : vector<2x8x1xf32> to vector<2x8x32xf32>
    %30 = arith.mulf %29, %0 : vector<2x8x32xf32>
    %cst_12 = arith.constant dense<0.000000e+00> : vector<2x32xf32>
    %31 = vector.multi_reduction <add>, %30, %cst_12 [1] : vector<2x8x32xf32> to vector<2x32xf32>
    %c0_13 = arith.constant 0 : index
    %c0_14 = arith.constant 0 : index
    %32 = vector.load %arg5[%c0_13, %c0_14] : memref<2x32xf32, #tpu.memory_space<vmem>>, vector<2x32xf32>
    tpu.vector_store %arg5[%c0_13, %c0_14], %31 {strides = array<i32>} : memref<2x32xf32, #tpu.memory_space<vmem>>, vector<2x32xf32>,
    %c0_15 = arith.constant 0 : index
    %c0_16 = arith.constant 0 : index
    %33 = vector.load %arg6[%c0_15, %c0_16] : memref<2x8xf32, #tpu.memory_space<vmem>>, vector<2x8xf32>
    tpu.vector_store %arg6[%c0_15, %c0_16], %27 {strides = array<i32>} : memref<2x8xf32, #tpu.memory_space<vmem>>, vector<2x8xf32>,
    return
  }
  func.func @transform_0(%arg0: i32) -> (i32, i32, i32) {
    %c0_i32 = arith.constant 0 : i32
    %c0_i32_0 = arith.constant 0 : i32
    %c0_i32_1 = arith.constant 0 : i32
    return %arg0, %c0_i32, %c0_i32_0 : i32, i32, i32
  }
  func.func @transform_1(%arg0: i32) -> (i32, i32) {
    %c0_i32 = arith.constant 0 : i32
    %c0_i32_0 = arith.constant 0 : i32
    return %arg0, %c0_i32 : i32, i32
  }
  func.func @transform_2(%arg0: i32) -> (i32, i32) {
    %c0_i32 = arith.constant 0 : i32
    %c0_i32_0 = arith.constant 0 : i32
    %c0_i32_1 = arith.constant 0 : i32
    return %c0_i32, %c0_i32_0 : i32, i32
  }
  func.func @transform_3(%arg0: i32) -> (i32, i32) {
    %c0_i32 = arith.constant 0 : i32
    %c0_i32_0 = arith.constant 0 : i32
    %c0_i32_1 = arith.constant 0 : i32
    return %c0_i32, %c0_i32_0 : i32, i32
  }
  func.func @transform_4(%arg0: i32) -> (i32, i32) {
    %c0_i32 = arith.constant 0 : i32
    %c0_i32_0 = arith.constant 0 : i32
    return %arg0, %c0_i32 : i32, i32
  }
  func.func @transform_5(%arg0: i32) -> (i32, i32) {
    %c0_i32 = arith.constant 0 : i32
    %c0_i32_0 = arith.constant 0 : i32
    return %arg0, %c0_i32 : i32, i32
  }
}

</mosaic_0001>

<llo_original>
// kernel: tpu_custom_call.1
$region0: #{tpu_custom_call.1}
  #allocation0 [shape = 'u32[]', space=smem, size = 0x4, offset = 0x4, fixed_abs, tag = 'smem constant byte address 0x4 - core index']
  #allocation1 [shape = 'u32[72,128]{1,0:T(1,128)}', space=vmem, size = 0x9000, scoped, tag = 'internal scratch']
  %s0 = inlined_call_operand.vmem [shape: f32[2,8,32], index: 0, kind: input, shape index: {}]
  %s1 = inlined_call_operand.vmem [shape: f32[2,16], index: 1, kind: input, shape index: {}]
  %s2 = inlined_call_operand.vmem [shape: f32[32,16], index: 2, kind: input, shape index: {}]
  %s3 = inlined_call_operand.vmem [shape: f32[1,16], index: 3, kind: input, shape index: {}]
  %s4 = inlined_call_operand.hbm [shape: f32[2,32], index: 4, kind: output, shape index: {0}]
  %s5 = inlined_call_operand.hbm [shape: f32[2,8], index: 5, kind: output, shape index: {1}]
  %6 = xla_tuple %s4, %s5
  %s7 = sld [smem:[#allocation0]]
  $region34: #{tpu_custom_call.1} parent=0
    _
  %s9 = ssub.s32 1, %s7
  %s10 = scalar_select 0, %s9, %s7
  $region1: #{tpu_custom_call.1} parent=0
    #allocation2 [shape = 'u8[1024]{0}', space=vmem, size = 0x400, scoped, tag = 'output window, operand 0, single buffered']
    #allocation3 [shape = 's32[1]{0}', space=sflag, size = 0x4, scoped, tag = 'scoped memory for tpu_custom_call.1']
    #allocation4 [shape = 'u8[1024]{0}', space=vmem, size = 0x400, scoped, tag = 'output window, operand 1, single buffered']
    #allocation5 [shape = 's32[1]{0}', space=sflag, size = 0x4, scoped, tag = 'scoped memory for tpu_custom_call.1']
    %11 = vsyncpa [#allocation3], 0
    %12 = vsyncpa [#allocation5], 0
    // Predicated region
    $region2: #{tpu_custom_call.1} parent=1 // pred_check
      _
    $region3: #{tpu_custom_call.1} parent=1 // pred_check_branch
      %14 = sbr.rel (0) target = $region5
    $region4: #{tpu_custom_call.1} parent=1 // pred_region
      _
    $region5: #{tpu_custom_call.1} parent=1 // pred_fallthru
      _
    // Predicated region
    $region6: #{tpu_custom_call.1} parent=1 // pred_check
      _
    $region7: #{tpu_custom_call.1} parent=1 // pred_check_branch
      %16 = sbr.rel (0) target = $region9
    $region8: #{tpu_custom_call.1} parent=1 // pred_region
      _
    $region9: #{tpu_custom_call.1} parent=1 // pred_fallthru
      _
    // Predicated region
    $region10: #{tpu_custom_call.1} parent=1 // pred_check
      _
    $region11: #{tpu_custom_call.1} parent=1 // pred_check_branch
      %18 = sbr.rel (0) target = $region13
    $region12: #{tpu_custom_call.1} parent=1 // pred_region
      _
    $region13: #{tpu_custom_call.1} parent=1 // pred_fallthru
      _
    // Predicated region
    $region14: #{tpu_custom_call.1} parent=1 // pred_check
      _
    $region15: #{tpu_custom_call.1} parent=1 // pred_check_branch
      %20 = sbr.rel (0) target = $region17
    $region16: #{tpu_custom_call.1} parent=1 // pred_region
      _
    $region17: #{tpu_custom_call.1} parent=1 // pred_fallthru
      _
    %v21 = vld [vmem:[%s0] sm:$0xff]
    %v22 = vld [vmem:[%s0 + $0x8] sm:$0xff]
    %v23 = vld [vmem:[%s2] sm:$0xff]
    %v24 = vld [vmem:[%s2 + $0x8] sm:$0xff]
    %v25 = vld [vmem:[%s2 + $0x10] sm:$0xff]
    %v26 = vld [vmem:[%s2 + $0x18] sm:$0xff]
    %v27 = vld [vmem:[%s3] sm:$0x1]
    %v29 = vperm.slane %v27, 0
    %vm31 = vcmask 261120
    %v33 = vsel %vm31, %v21, 0
    %v36 = vsel %vm31, %v22, 0
    %38 = vmatpush.msra.mxu0 0.0
    %39 = vmatpush.msra.mxu0 0.0
    %40 = vmatpush.msra.mxu0 0.0
    %41 = vmatpush.msra.mxu0 0.0
    %42 = vmatpush.msra.mxu0 0.0
    %43 = vmatpush.msra.mxu0 0.0
    %44 = vmatpush.msra.mxu0 0.0
    %45 = vmatpush.msra.mxu0 0.0
    %46 = vmatpush.msra.mxu0 0.0
    %47 = vmatpush.msra.mxu0 0.0
    %48 = vmatpush.msra.mxu0 0.0
    %49 = vmatpush.msra.mxu0 0.0
    %50 = vmatpush.msra.mxu0 %v26
    %51 = vmatpush.msra.mxu0 %v25
    %52 = vmatpush.msra.mxu0 %v24
    %53 = vmatpush.msra.mxu0 %v23
    %54 = vmatmul.f32.gmra.mxu0 %v33
    %v55 = vpop.f32.mrf.mxu0
    %v56 = vadd.f32 %v29, %v55
    %57 = vmatmul.f32.gmra.mxu0 %v36
    %v58 = vpop.f32.mrf.mxu0
    %v59 = vadd.f32 %v29, %v58
    %60 = vdwg.mxu0
    %v61 = vtanh.pop %v56
    %v62 = vtanh.pop %v59
    %v63 = vld [vmem:[%s1] sm:$0x3]
    %v65 = vrot.slane %v63, 1
    %v66 = vperm.slane %v63, 0
    %v67 = vperm.slane %v65, 0
    %v70 = vmul.f32 %v61, %v66
    %v71 = vmul.f32 %v62, %v67
    %vm72 = vcmask 130048
    %v73 = vsel %vm72, %v70, 0.0
    %74 = vadd.xlane.f32.xlu0 %v73
    %v75 = vpop.xlane.xlu0 %74
    %v76 = vsel %vm72, %v71, 0.0
    %77 = vadd.xlane.f32.xlu0 %v76
    %v78 = vpop.xlane.xlu0 %77
    %v81 = vlaneseq
    %v82 = vand.u32 %v81, 127
    %v83 = vperm.slane %v75, %v82
    %v84 = vperm.slane %v78, %v82
    %vm85 = vcmask 1041409
    %v86 = vsel %vm85, %v84, %v83
    %vm88 = vcmask 58368
    %v89 = vsel %vm88, %v86, -inf
    %90 = vmax.xlane.f32.xlu0 %v89
    %v91 = vpop.xlane.xlu0 %90
    %v93 = vperm.slane %v91, 0
    %v94 = vperm.slane %v91, 1
    %v97 = vsub.f32 %v75, %v93
    %v98 = vsub.f32 %v78, %v94
    %v99 = vmul.f32 %v97, 1.442695
    %v100 = vpow.pop %v99
    %v101 = vmul.f32 %v98, 1.442695
    %v102 = vpow.pop %v101
    %105 = vset.pattern.permute.xlu0 0
    %106 = vperm.xlu0 %105, %v100
    %v107 = vpop.permute.xlu0 %106
    %108 = vset.pattern.permute.xlu0 0
    %109 = vperm.xlu0 %108, %v102
    %v110 = vpop.permute.xlu0 %109
    %v111 = vperm.slane %v107, %v82
    %v112 = vperm.slane %v110, %v82
    %v113 = vsel %vm85, %v112, %v111
    %v115 = vsel %vm88, %v113, 0.0
    %116 = vadd.xlane.f32.xlu0 %v115
    %v117 = vpop.xlane.xlu0 %116
    %v118 = vrcp.pop %v117
    %v119 = vmul.f32 %v117, %v118
    %v120 = vsub.f32 2.0, %v119
    %v121 = vmul.f32 %v118, %v120
    %v123 = vperm.slane %v121, 0
    %v124 = vperm.slane %v121, 1
    %v127 = vmul.f32 %v100, %v123
    %v128 = vmul.f32 %v102, %v124
    %130 = vset.pattern.permute.xlu0 0
    %131 = vperm.xlu0 %130, %v127
    %v132 = vpop.permute.xlu0 %131
    %135 = vset.pattern.permute.xlu0 0
    %136 = vperm.xlu0 %135, %v128
    %v137 = vpop.permute.xlu0 %136
    %v139 = vmul.f32 %v132, %v21
    %v140 = vmul.f32 %v137, %v22
    %v141 = vsel %vm31, %v139, 0.0
    %v142 = vrot.slane %v141, 4
    %v143 = vadd.f32 %v141, %v142
    %v144 = vrot.slane %v143, 2
    %v145 = vadd.f32 %v143, %v144
    %v146 = vrot.slane %v145, 1
    %v147 = vadd.f32 %v145, %v146
    %v148 = vsel %vm31, %v140, 0.0
    %v149 = vrot.slane %v148, 4
    %v150 = vadd.f32 %v148, %v149
    %v151 = vrot.slane %v150, 2
    %v152 = vadd.f32 %v150, %v151
    %v153 = vrot.slane %v152, 1
    %v154 = vadd.f32 %v152, %v153
    %v157 = vsel %vm85, %v154, %v147
    %vm159 = vcmask 254976
    %160 = vst.msk [vmem:[#allocation2] sm:$0x3] %vm159, %v157
    %v161 = vperm.slane %v132, %v82
    %v162 = vperm.slane %v137, %v82
    %v163 = vsel %vm85, %v162, %v161
    %165 = vst.msk [vmem:[#allocation4] sm:$0x3] %vm88, %v163
    // Predicated region
    $region18: #{tpu_custom_call.1} parent=1 // pred_check
      _
    $region19: #{tpu_custom_call.1} parent=1 // pred_check_branch
      %167 = sbr.rel (0) target = $region21
    $region20: #{tpu_custom_call.1} parent=1 // pred_region
      %169 = vsyncadd [#allocation3], 0
      %s171 = sshll.u32 [#allocation2], 4
      %s172 = int_to_ptr.vmem [resolvable:$true] %s171
      %s173 = sshll.u32 %s4, 4
      %s174 = int_to_ptr.hbm [resolvable:$true] %s173
      %176 = dma.vmem_to_hbm [thread:$0]  %s172, 32, %s174, [#allocation3]
    $region21: #{tpu_custom_call.1} parent=1 // pred_fallthru
      _
    // Predicated region
    $region22: #{tpu_custom_call.1} parent=1 // pred_check
      _
    $region23: #{tpu_custom_call.1} parent=1 // pred_check_branch
      %178 = sbr.rel (0) target = $region25
    $region24: #{tpu_custom_call.1} parent=1 // pred_region
      %180 = vsyncadd [#allocation5], 0
      %s182 = sshll.u32 [#allocation4], 4
      %s183 = int_to_ptr.vmem [resolvable:$true] %s182
      %s184 = sshll.u32 %s5, 4
      %s185 = int_to_ptr.hbm [resolvable:$true] %s184
      %187 = dma.vmem_to_hbm [thread:$0]  %s183, 32, %s185, [#allocation5]
    $region25: #{tpu_custom_call.1} parent=1 // pred_fallthru
      _
    // Predicated region
    $region26: #{tpu_custom_call.1} parent=1 // pred_check
      _
    $region27: #{tpu_custom_call.1} parent=1 // pred_check_branch
      %189 = sbr.rel (0) target = $region29
    $region28: #{tpu_custom_call.1} parent=1 // pred_region
      %191 = dma.done [#allocation3], 32
    $region29: #{tpu_custom_call.1} parent=1 // pred_fallthru
      _
    // Predicated region
    $region30: #{tpu_custom_call.1} parent=1 // pred_check
      _
    $region31: #{tpu_custom_call.1} parent=1 // pred_check_branch
      %193 = sbr.rel (0) target = $region33
    $region32: #{tpu_custom_call.1} parent=1 // pred_region
      %195 = dma.done [#allocation5], 32
    $region33: #{tpu_custom_call.1} parent=1 // pred_fallthru
      _
    %196 = vsyncpa [#allocation3], 1
    %197 = vsyncpa [#allocation5], 1

</llo_original>
